<compile_context>
chip_gen: v5e
topology: v5e:2x2
jax: 0.10.0
libtpu: 0.0.40
codegen_flags: <defaults>
</compile_context>

<pallas_src>
import jax
import jax.numpy as jnp
from jax.experimental import pallas as pl
from jax.experimental.pallas import tpu as pltpu

IN_FEATURES = 3
OUT_FEATURES = 8


def linear_sub_relu_kernel(x_ref, wb_ref, o_ref):
    # x_ref:  (B, IN_FEATURES)            -- activations
    # wb_ref: (IN_FEATURES + 1, OUT_FEATURES)
    #         rows 0..IN_FEATURES-1 = W^T, last row = bias - 1
    # o_ref:  (B, OUT_FEATURES)
    x = x_ref[...]
    wb = wb_ref[...]

    # Start from the (bias - 1) row, broadcast over the batch.
    y = wb[IN_FEATURES:IN_FEATURES + 1, :]          # (1, OUT_FEATURES)
    # K=3 contraction as 3 lane/sublane-broadcast VPU FMAs (MXU skipped on
    # purpose: the dot is ~200 MACs and would be pure MXU push/pop latency).
    for k in range(IN_FEATURES):
        y = y + x[:, k:k + 1] * wb[k:k + 1, :]      # (B, OUT_FEATURES)

    o_ref[...] = jnp.maximum(y, 0.0)


def prepare_params(weight, bias):
    """One-time parameter prep (hoisted off the hot path).

    weight: (OUT_FEATURES, IN_FEATURES) f32, PyTorch nn.Linear layout.
    bias:   (OUT_FEATURES,) f32.
    Returns a single packed (IN_FEATURES+1, OUT_FEATURES) array with the
    constant -1 folded into the bias row.
    """
    wb = jnp.zeros((IN_FEATURES + 1, OUT_FEATURES), jnp.float32)
    wb = wb.at[:IN_FEATURES, :].set(weight.T)
    wb = wb.at[IN_FEATURES, :].set(bias - 1.0)
    return wb


@jax.jit
def model2_forward(x, wb):
    """x: (B, 3) f32; wb: packed params from prepare_params. Returns (B, 8)."""
    B = x.shape[0]  # static under jit
    return pl.pallas_call(
        linear_sub_relu_kernel,
        out_shape=jax.ShapeDtypeStruct((B, OUT_FEATURES), jnp.float32),
        in_specs=[
            pl.BlockSpec(memory_space=pltpu.MemorySpace.VMEM),
            pl.BlockSpec(memory_space=pltpu.MemorySpace.VMEM),
        ],
        out_specs=pl.BlockSpec(memory_space=pltpu.MemorySpace.VMEM),
    )(x, wb)


if __name__ == "__main__":
    key = jax.random.PRNGKey(0)
    kx, kw, kb = jax.random.split(key, 3)

    # Input: (1, 3), like x2 = torch.randn(1, 3)
    x = jax.random.normal(kx, (1, IN_FEATURES), dtype=jnp.float32)

    # Deterministic parameters for Linear(3, 8): weight (8, 3), bias (8,)
    weight = jax.random.normal(kw, (OUT_FEATURES, IN_FEATURES), dtype=jnp.float32) * 0.1
    bias = jax.random.normal(kb, (OUT_FEATURES,), dtype=jnp.float32) * 0.1

    # One-time parameter prep (call-invariant).
    wb = prepare_params(weight, bias)

    out = model2_forward(x, wb)
    out = jax.block_until_ready(out)

    # Reference check in plain JAX.
    ref = jnp.maximum(x @ weight.T + bias - 1.0, 0.0)
    assert out.shape == (1, OUT_FEATURES), out.shape
    assert jnp.allclose(out, ref, atol=1e-5, rtol=1e-5), (out, ref)

    print("KERNEL_OK")
</pallas_src>

<mosaic_0001>
module attributes {stable_mosaic.version = 11 : i64} {
  func.func @linear_sub_relu_kernel(%arg0: memref<1x3xf32, #tpu.memory_space<vmem>>, %arg1: memref<4x8xf32, #tpu.memory_space<vmem>>, %arg2: memref<1x8xf32, #tpu.memory_space<vmem>>) attributes {dimension_semantics = [], scalar_prefetch = 0 : i64, scratch_operands = 0 : i64, tpu.core_type = #tpu.core_type<tc>} {
    %c0 = arith.constant 0 : index
    %c0_0 = arith.constant 0 : index
    %0 = vector.load %arg0[%c0, %c0_0] : memref<1x3xf32, #tpu.memory_space<vmem>>, vector<1x3xf32>
    %c0_1 = arith.constant 0 : index
    %c0_2 = arith.constant 0 : index
    %1 = vector.load %arg1[%c0_1, %c0_2] : memref<4x8xf32, #tpu.memory_space<vmem>>, vector<4x8xf32>
    %2 = vector.extract_strided_slice %1 {offsets = [3, 0], sizes = [1, 8], strides = [1, 1]} : vector<4x8xf32> to vector<1x8xf32>
    %3 = vector.extract_strided_slice %0 {offsets = [0, 0], sizes = [1, 1], strides = [1, 1]} : vector<1x3xf32> to vector<1x1xf32>
    %4 = vector.extract_strided_slice %1 {offsets = [0, 0], sizes = [1, 8], strides = [1, 1]} : vector<4x8xf32> to vector<1x8xf32>
    %5 = vector.broadcast %3 : vector<1x1xf32> to vector<1x8xf32>
    %6 = arith.mulf %5, %4 : vector<1x8xf32>
    %7 = arith.addf %2, %6 : vector<1x8xf32>
    %8 = vector.extract_strided_slice %0 {offsets = [0, 1], sizes = [1, 1], strides = [1, 1]} : vector<1x3xf32> to vector<1x1xf32>
    %9 = vector.extract_strided_slice %1 {offsets = [1, 0], sizes = [1, 8], strides = [1, 1]} : vector<4x8xf32> to vector<1x8xf32>
    %10 = vector.broadcast %8 : vector<1x1xf32> to vector<1x8xf32>
    %11 = arith.mulf %10, %9 : vector<1x8xf32>
    %12 = arith.addf %7, %11 : vector<1x8xf32>
    %13 = vector.extract_strided_slice %0 {offsets = [0, 2], sizes = [1, 1], strides = [1, 1]} : vector<1x3xf32> to vector<1x1xf32>
    %14 = vector.extract_strided_slice %1 {offsets = [2, 0], sizes = [1, 8], strides = [1, 1]} : vector<4x8xf32> to vector<1x8xf32>
    %15 = vector.broadcast %13 : vector<1x1xf32> to vector<1x8xf32>
    %16 = arith.mulf %15, %14 : vector<1x8xf32>
    %17 = arith.addf %12, %16 : vector<1x8xf32>
    %cst = arith.constant 0.000000e+00 : f32
    %18 = vector.broadcast %cst : f32 to vector<1x8xf32>
    %19 = arith.maximumf %17, %18 : vector<1x8xf32>
    %c0_3 = arith.constant 0 : index
    %c0_4 = arith.constant 0 : index
    %20 = vector.load %arg2[%c0_3, %c0_4] : memref<1x8xf32, #tpu.memory_space<vmem>>, vector<1x8xf32>
    tpu.vector_store %arg2[%c0_3, %c0_4], %19 {strides = array<i32>} : memref<1x8xf32, #tpu.memory_space<vmem>>, vector<1x8xf32>,
    return
  }
}

</mosaic_0001>

<llo_original>
// kernel: model2_forward.1
$region0: #{model2_forward.1}
  #allocation0 [shape = 'u32[]', space=smem, size = 0x4, offset = 0x4, fixed_abs, tag = 'smem constant byte address 0x4 - core index']
  #allocation1 [shape = 'u32[72,128]{1,0:T(1,128)}', space=vmem, size = 0x9000, scoped, tag = 'internal scratch']
  %s0 = inlined_call_operand.hbm [shape: f32[1,3], index: 0, kind: input, shape index: {}]
  %s1 = inlined_call_operand.hbm [shape: f32[4,8], index: 1, kind: input, shape index: {}]
  %s2 = inlined_call_operand.hbm [shape: f32[1,8], index: 2, kind: output, shape index: {}]
  %s3 = sld [smem:[#allocation0]]
  $region26: #{model2_forward.1} parent=0
    _
  %s5 = ssub.s32 1, %s3
  %s6 = scalar_select 0, %s5, %s3
  $region1: #{model2_forward.1} parent=0
    #allocation2 [shape = 'u8[512]{0}', space=vmem, size = 0x400, scoped, tag = 'input window, operand 0, single buffered']
    #allocation3 [shape = 's32[1]{0}', space=sflag, size = 0x4, scoped, tag = 'scoped memory for model2_forward.1']
    #allocation4 [shape = 's32[1]{0}', space=sflag, size = 0x4, scoped, tag = 'scoped memory for model2_forward.1']
    #allocation5 [shape = 'u8[2048]{0}', space=vmem, size = 0x800, scoped, tag = 'input window, operand 1, single buffered']
    #allocation6 [shape = 's32[1]{0}', space=sflag, size = 0x4, scoped, tag = 'scoped memory for model2_forward.1']
    #allocation7 [shape = 'u8[512]{0}', space=vmem, size = 0x400, scoped, tag = 'output window, operand 0, single buffered']
    %7 = vsyncpa [#allocation3], 0
    %8 = vsyncpa [#allocation6], 0
    %9 = vsyncpa [#allocation4], 0
    // Predicated region
    $region2: #{model2_forward.1} parent=1 // pred_check
      _
    $region3: #{model2_forward.1} parent=1 // pred_check_branch
      %11 = sbr.rel (0) target = $region5
    $region4: #{model2_forward.1} parent=1 // pred_region
      %13 = vsyncadd [#allocation3], 0
      %s15 = sshll.u32 %s0, 4
      %s16 = int_to_ptr.hbm [resolvable:$true] %s15
      %s17 = sshll.u32 [#allocation2], 4
      %s18 = int_to_ptr.vmem [resolvable:$true] %s17
      %20 = dma.hbm_to_vmem [thread:$0]  %s16, 16, %s18, [#allocation3]
    $region5: #{model2_forward.1} parent=1 // pred_fallthru
      _
    // Predicated region
    $region6: #{model2_forward.1} parent=1 // pred_check
      _
    $region7: #{model2_forward.1} parent=1 // pred_check_branch
      %22 = sbr.rel (0) target = $region9
    $region8: #{model2_forward.1} parent=1 // pred_region
      %24 = vsyncadd [#allocation6], 0
      %s26 = sshll.u32 %s1, 4
      %s27 = int_to_ptr.hbm [resolvable:$true] %s26
      %s28 = sshll.u32 [#allocation5], 4
      %s29 = int_to_ptr.vmem [resolvable:$true] %s28
      %31 = dma.hbm_to_vmem [thread:$0]  %s27, 64, %s29, [#allocation6]
    $region9: #{model2_forward.1} parent=1 // pred_fallthru
      _
    // Predicated region
    $region10: #{model2_forward.1} parent=1 // pred_check
      _
    $region11: #{model2_forward.1} parent=1 // pred_check_branch
      %33 = sbr.rel (0) target = $region13
    $region12: #{model2_forward.1} parent=1 // pred_region
      %35 = dma.done [#allocation3], 16
    $region13: #{model2_forward.1} parent=1 // pred_fallthru
      _
    // Predicated region
    $region14: #{model2_forward.1} parent=1 // pred_check
      _
    $region15: #{model2_forward.1} parent=1 // pred_check_branch
      %37 = sbr.rel (0) target = $region17
    $region16: #{model2_forward.1} parent=1 // pred_region
      %39 = dma.done [#allocation6], 64
    $region17: #{model2_forward.1} parent=1 // pred_fallthru
      _
    %v40 = vld [vmem:[#allocation2] sm:$0x1]
    %v41 = vld [vmem:[#allocation5] sm:$0xf]
    %43 = vset.pattern.permute.xlu0 0
    %44 = vperm.xlu0 %43, %v40
    %v45 = vpop.permute.xlu0 %44
    %v47 = vperm.slane %v45, 0
    %v48 = vmul.f32 %v47, %v41
    %v50 = vrot.slane %v48, 5
    %v52 = vadd.f32 %v41, %v50
    %53 = vset.pattern.permute.xlu0 1
    %54 = vperm.xlu0 %53, %v40
    %v55 = vpop.permute.xlu0 %54
    %v57 = vperm.slane %v55, 0
    %v58 = vmul.f32 %v57, %v41
    %v60 = vrot.slane %v58, 6
    %v62 = vadd.f32 %v52, %v60
    %63 = vset.pattern.permute.xlu0 2
    %64 = vperm.xlu0 %63, %v40
    %v65 = vpop.permute.xlu0 %64
    %v67 = vperm.slane %v65, 0
    %v68 = vmul.f32 %v67, %v41
    %v70 = vrot.slane %v68, 7
    %v72 = vadd.f32 %v62, %v70
    %v73 = vmax.f32 %v72, 0.0
    %vm74 = vcmask 60419
    %75 = vst.msk [vmem:[#allocation7 - $0x3] sm:$0x8] %vm74, %v73
    // Predicated region
    $region18: #{model2_forward.1} parent=1 // pred_check
      _
    $region19: #{model2_forward.1} parent=1 // pred_check_branch
      %77 = sbr.rel (0) target = $region21
    $region20: #{model2_forward.1} parent=1 // pred_region
      %79 = vsyncadd [#allocation4], 0
      %s81 = sshll.u32 [#allocation7], 4
      %s82 = int_to_ptr.vmem [resolvable:$true] %s81
      %s83 = sshll.u32 %s2, 4
      %s84 = int_to_ptr.hbm [resolvable:$true] %s83
      %86 = dma.vmem_to_hbm [thread:$0]  %s82, 16, %s84, [#allocation4]
    $region21: #{model2_forward.1} parent=1 // pred_fallthru
      _
    // Predicated region
    $region22: #{model2_forward.1} parent=1 // pred_check
      _
    $region23: #{model2_forward.1} parent=1 // pred_check_branch
      %88 = sbr.rel (0) target = $region25
    $region24: #{model2_forward.1} parent=1 // pred_region
      %90 = dma.done [#allocation4], 16
    $region25: #{model2_forward.1} parent=1 // pred_fallthru
      _
    %91 = vsyncpa [#allocation3], 1
    %92 = vsyncpa [#allocation6], 1
    %93 = vsyncpa [#allocation4], 1

</llo_original>
